<compile_context>
chip_gen: v7x
topology: tpu7x:2x2x1
jax: 0.10.0
libtpu: 0.0.40
codegen_flags: <defaults>
</compile_context>

<pallas_src>
import functools

import jax
import jax.numpy as jnp
from jax.experimental import pallas as pl
from jax.experimental.pallas import tpu as pltpu


# ----------------------------- Pallas kernel --------------------------------

def _qed_kernel(x_ref, cmask_ref, alpha_ref, w_ref, b_ref, o_ref, patch_ref,
                *, W, d):
    """One (branch, image): PReLU -> masked dilated 3x3 conv as one matmul.

    x_ref     : (Cin,  H*W)     image, spatial flattened on lanes
    cmask_ref : (2,    H*W)     column keep-masks: row0 for dx=+d, row1 for dx=-d
    alpha_ref : (Cin,  1)       per-channel PReLU slope (f32)
    w_ref     : (Cout, 9*Cin)   masked conv weight, (ky, kx, cin)-minor order
    b_ref     : (Cout, 1)       conv bias (f32)
    o_ref     : (Cout, H*W)     output (f32, lane-dense store)
    patch_ref : (9*Cin, H*W)    VMEM scratch: im2col buffer
    """
    Cin = x_ref.shape[0]
    mm_dtype = w_ref.dtype

    # PReLU in f32 (VPU compare/select; v5e has no bf16 VALU path).
    x = x_ref[...].astype(jnp.float32)
    alpha = alpha_ref[...]                       # (Cin, 1) broadcast over lanes
    xa = jnp.where(x >= 0.0, x, alpha * x)

    # Pre-masked copies for the three horizontal tap offsets.  Masking the
    # *source* columns lets every (ky, kx) tap become a flat zero-filled lane
    # shift of the whole (Cin, H*W) image: the elements that would wrap into
    # a neighbouring row are exactly the pre-masked (zeroed) columns, and the
    # flat zero-fill covers the out-of-range rows.
    cm = cmask_ref[...]                          # (2, H*W) f32 {0,1}
    x_by_dx = {
        +d: (xa * cm[0:1, :]).astype(mm_dtype),  # dx=+d: zero the first d cols
         0: xa.astype(mm_dtype),
        -d: (xa * cm[1:2, :]).astype(mm_dtype),  # dx=-d: zero the last d cols
    }

    # im2col: 9 zero-filled lane shifts written into the VMEM scratch.
    for ky in range(3):
        dy = (ky - 1) * d
        for kx in range(3):
            dx = (kx - 1) * d
            src = x_by_dx[dx]
            delta = dy * W + dx                  # flat shift: t[q] = src[q+delta]
            if delta == 0:
                t = src
            elif delta > 0:
                t = jnp.concatenate(
                    [src[:, delta:], jnp.zeros((Cin, delta), mm_dtype)], axis=1)
            else:
                t = jnp.concatenate(
                    [jnp.zeros((Cin, -delta), mm_dtype), src[:, :delta]], axis=1)
            r = (ky * 3 + kx) * Cin
            patch_ref[r:r + Cin, :] = t

    # One MXU matmul (Cout, 9*Cin) x (9*Cin, H*W), f32 accumulation.
    acc = jnp.dot(w_ref[...], patch_ref[...],
                  preferred_element_type=jnp.float32)
    o_ref[...] = (acc + b_ref[...]).astype(o_ref.dtype)


# ------------------------------- wrapper -------------------------------------

_MASK_Q2 = jnp.array([[1, 1, 1], [1, 1, 0], [1, 0, 0]], dtype=jnp.float32)
_MASK_E2 = jnp.array([[1, 1, 1], [0, 1, 1], [0, 0, 1]], dtype=jnp.float32)
_MASK_D2 = jnp.array([[0, 0, 0], [1, 1, 1], [1, 1, 1]], dtype=jnp.float32)
_BRANCHES = ("q2", "e2", "d2")
_MASKS = {"q2": _MASK_Q2, "e2": _MASK_E2, "d2": _MASK_D2}


def init_qed_params(key, in_ch, out_ch):
    """Deterministic parameter init matching the module's __init__ shapes."""
    keys = jax.random.split(key, 6)
    params = {}
    for i, name in enumerate(_BRANCHES):
        kw, kb = keys[2 * i], keys[2 * i + 1]
        bound = 1.0 / (in_ch * 9) ** 0.5
        w_oihw = jax.random.uniform(kw, (out_ch, in_ch, 3, 3),
                                    jnp.float32, -bound, bound)
        b = jax.random.uniform(kb, (out_ch,), jnp.float32, -bound, bound)
        alpha = jnp.zeros((in_ch,), jnp.float32)   # nn.PReLU(in_ch, 0)
        params[name] = dict(w_oihw=w_oihw, bias=b, alpha=alpha)
    return params


def qed_layer_forward(inputs_nchw, params, dilation, *,
                      compute_dtype=jnp.float32):
    """inputs_nchw: list of 3 arrays (N, Cin, H, W).
    Returns list of 3 float32 arrays (N, Cout, H, W), matching the module."""
    N, Cin, H, W = inputs_nchw[0].shape
    HW = H * W
    d = int(dilation)
    assert d >= 1, "dilation must be >= 1"

    # Branch inputs stacked NCHW-native, spatial flattened onto the lane axis
    # (reshape is free: no NHWC transpose, no jnp.pad -> no extra HBM passes).
    x_all = (jnp.stack(inputs_nchw, axis=0)
             .reshape(3, N, Cin, HW)
             .astype(compute_dtype))

    # Per-branch masked weights in im2col layout (Cout, 9*Cin), minor order
    # (ky, kx, cin) to match the tap order written by the kernel.
    w_list, b_list, a_list = [], [], []
    for name in _BRANCHES:
        p = params[name]
        w_masked = p["w_oihw"] * _MASKS[name][None, None, :, :]  # (Cout,Cin,3,3)
        w_list.append(jnp.transpose(w_masked, (0, 2, 3, 1))
                      .reshape(w_masked.shape[0], -1))
        b_list.append(p["bias"][:, None])
        a_list.append(p["alpha"][:, None])
    w_all = jnp.stack(w_list, axis=0).astype(compute_dtype)   # (3, Cout, 9*Cin)
    b_all = jnp.stack(b_list, axis=0).astype(jnp.float32)     # (3, Cout, 1)
    a_all = jnp.stack(a_list, axis=0).astype(jnp.float32)     # (3, Cin, 1)
    Cout = w_all.shape[1]

    # Column keep-masks for the +d / -d horizontal tap offsets (host-side).
    col = jnp.tile(jnp.arange(W, dtype=jnp.int32), H)          # (H*W,)
    cmask = jnp.stack([(col >= d).astype(jnp.float32),         # for dx = +d
                       (col < W - d).astype(jnp.float32)],     # for dx = -d
                      axis=0)                                  # (2, H*W)

    kernel = functools.partial(_qed_kernel, W=W, d=d)

    # NOTE: for large H*W / N, tile the lane axis into 128-multiple strips
    # (with a dilation-sized halo) and/or take several batch images per grid
    # step, and set vmem_limit_bytes for v7x's 64 MiB VMEM.  Unnecessary at
    # these shapes (whole per-step working set is a few tens of KiB).
    out = pl.pallas_call(
        kernel,
        out_shape=jax.ShapeDtypeStruct((3, N, Cout, HW), jnp.float32),
        grid=(3, N),
        in_specs=[
            pl.BlockSpec((None, None, Cin, HW), lambda b, n: (b, n, 0, 0)),
            pl.BlockSpec((2, HW), lambda b, n: (0, 0)),
            pl.BlockSpec((None, Cin, 1), lambda b, n: (b, 0, 0)),
            pl.BlockSpec((None, Cout, 9 * Cin), lambda b, n: (b, 0, 0)),
            pl.BlockSpec((None, Cout, 1), lambda b, n: (b, 0, 0)),
        ],
        out_specs=pl.BlockSpec((None, None, Cout, HW),
                               lambda b, n: (b, n, 0, 0)),
        scratch_shapes=[pltpu.VMEM((9 * Cin, HW), compute_dtype)],
        compiler_params=pltpu.CompilerParams(
            dimension_semantics=("parallel", "parallel")),
    )(x_all, cmask, a_all, w_all, b_all)

    out = out.reshape(3, N, Cout, H, W)
    return [out[0], out[1], out[2]]


# ------------------------- pure-JAX reference (check) ------------------------

def _reference_forward(inputs_nchw, params, dilation):
    """Pure-JAX f32 reference (lax conv), mirroring the PyTorch module."""
    outs = []
    for x, name in zip(inputs_nchw, _BRANCHES):
        p = params[name]
        alpha = p["alpha"][None, :, None, None]
        xa = jnp.where(x >= 0, x, alpha * x)
        w = p["w_oihw"] * _MASKS[name][None, None, :, :]
        y = jax.lax.conv_general_dilated(
            xa, w, window_strides=(1, 1),
            padding=[(dilation, dilation), (dilation, dilation)],
            rhs_dilation=(dilation, dilation),
            dimension_numbers=("NCHW", "OIHW", "NCHW"))
        outs.append(y + p["bias"][None, :, None, None])
    return outs


if __name__ == "__main__":
    N, C_IN, C_OUT, H, W = 2, 4, 4, 16, 16
    DILATION = 2

    key = jax.random.PRNGKey(0)
    k_params, k0, k1, k2 = jax.random.split(key, 4)
    params = init_qed_params(k_params, C_IN, C_OUT)

    inputs = [
        jax.random.normal(k0, (N, C_IN, H, W), jnp.float32),
        jax.random.normal(k1, (N, C_IN, H, W), jnp.float32),
        jax.random.normal(k2, (N, C_IN, H, W), jnp.float32),
    ]

    # --- f32 path: exact module semantics -----------------------------------
    outs = qed_layer_forward(inputs, params, DILATION)
    outs = [jax.block_until_ready(o) for o in outs]
    refs = _reference_forward(inputs, params, DILATION)
    for o, r in zip(outs, refs):
        assert o.shape == (N, C_OUT, H, W)
        err = float(jnp.max(jnp.abs(o - r)))
        assert err < 1e-3, f"f32 path mismatch vs reference conv: {err}"

    # --- bf16 compute path (recommended on v5e/v6e: halves HBM traffic, f32
    #     MXU accumulation).  Checked against the f32 reference driven with
    #     identically bf16-rounded activations and weights. ------------------
    outs_bf = qed_layer_forward(inputs, params, DILATION,
                                compute_dtype=jnp.bfloat16)
    outs_bf = [jax.block_until_ready(o) for o in outs_bf]
    q = lambda a: a.astype(jnp.bfloat16).astype(jnp.float32)
    params_q = {k: dict(w_oihw=q(v["w_oihw"]), bias=v["bias"], alpha=v["alpha"])
                for k, v in params.items()}
    refs_bf = _reference_forward([q(x) for x in inputs], params_q, DILATION)
    for o, r in zip(outs_bf, refs_bf):
        err = float(jnp.max(jnp.abs(o - r)))
        assert err < 2e-3, f"bf16 path mismatch vs quantized reference: {err}"

    print("KERNEL_OK")
</pallas_src>

<mosaic_0001>
module attributes {stable_mosaic.version = 11 : i64} {
  func.func @_qed_kernel(%arg0: i32, %arg1: i32, %arg2: memref<1x1x4x256xf32, #tpu.memory_space<vmem>>, %arg3: memref<2x256xf32, #tpu.memory_space<vmem>>, %arg4: memref<1x4x1xf32, #tpu.memory_space<vmem>>, %arg5: memref<1x4x36xf32, #tpu.memory_space<vmem>>, %arg6: memref<1x4x1xf32, #tpu.memory_space<vmem>>, %arg7: memref<1x1x4x256xf32, #tpu.memory_space<vmem>>, %arg8: memref<36x256xf32, #tpu.memory_space<vmem>>) attributes {dimension_semantics = [#tpu.dimension_semantics<parallel>, #tpu.dimension_semantics<parallel>], iteration_bounds = array<i64: 3, 2>, scalar_prefetch = 0 : i64, scratch_operands = 1 : i64, tpu.core_type = #tpu.core_type<tc>, window_params = [{transform_indices = @transform_0, window_bounds = array<i64: 1, 1, 4, 256>}, {pipeline_mode = #tpu.pipeline_mode<synchronous>, transform_indices = @transform_1, window_bounds = array<i64: 2, 256>}, {transform_indices = @transform_2, window_bounds = array<i64: 1, 4, 1>}, {transform_indices = @transform_3, window_bounds = array<i64: 1, 4, 36>}, {transform_indices = @transform_4, window_bounds = array<i64: 1, 4, 1>}, {transform_indices = @transform_5, window_bounds = array<i64: 1, 1, 4, 256>}]} {
    %c0 = arith.constant 0 : index
    %c0_0 = arith.constant 0 : index
    %c0_1 = arith.constant 0 : index
    %c0_2 = arith.constant 0 : index
    %0 = vector.load %arg2[%c0, %c0_0, %c0_1, %c0_2] : memref<1x1x4x256xf32, #tpu.memory_space<vmem>>, vector<1x1x4x256xf32>
    %1 = vector.shape_cast %0 : vector<1x1x4x256xf32> to vector<4x256xf32>
    %c0_3 = arith.constant 0 : index
    %c0_4 = arith.constant 0 : index
    %c0_5 = arith.constant 0 : index
    %2 = vector.load %arg4[%c0_3, %c0_4, %c0_5] : memref<1x4x1xf32, #tpu.memory_space<vmem>>, vector<1x4x1xf32>
    %3 = vector.shape_cast %2 : vector<1x4x1xf32> to vector<4x1xf32>
    %cst = arith.constant 0.000000e+00 : f32
    %4 = vector.broadcast %cst : f32 to vector<4x256xf32>
    %5 = arith.cmpf oge, %1, %4 : vector<4x256xf32>
    %6 = vector.broadcast %3 : vector<4x1xf32> to vector<4x256xf32>
    %7 = arith.mulf %6, %1 : vector<4x256xf32>
    %8 = arith.select %5, %1, %7 : vector<4x256xi1>, vector<4x256xf32>
    %c0_6 = arith.constant 0 : index
    %c0_7 = arith.constant 0 : index
    %9 = vector.load %arg3[%c0_6, %c0_7] : memref<2x256xf32, #tpu.memory_space<vmem>>, vector<2x256xf32>
    %10 = vector.extract_strided_slice %9 {offsets = [0, 0], sizes = [1, 256], strides = [1, 1]} : vector<2x256xf32> to vector<1x256xf32>
    %11 = vector.broadcast %10 : vector<1x256xf32> to vector<4x256xf32>
    %12 = arith.mulf %8, %11 : vector<4x256xf32>
    %13 = vector.extract_strided_slice %9 {offsets = [1, 0], sizes = [1, 256], strides = [1, 1]} : vector<2x256xf32> to vector<1x256xf32>
    %14 = vector.broadcast %13 : vector<1x256xf32> to vector<4x256xf32>
    %15 = arith.mulf %8, %14 : vector<4x256xf32>
    %cst_8 = arith.constant 0.000000e+00 : f32
    %16 = vector.broadcast %cst_8 : f32 to vector<4x34xf32>
    %17 = vector.extract_strided_slice %15 {offsets = [0, 0], sizes = [4, 222], strides = [1, 1]} : vector<4x256xf32> to vector<4x222xf32>
    %18 = tpu.concatenate %16, %17 in 1 : vector<4x34xf32>, vector<4x222xf32> -> vector<4x256xf32>
    %c0_9 = arith.constant 0 : index
    %c0_10 = arith.constant 0 : index
    %19 = vector.load %arg8[%c0_9, %c0_10] : memref<36x256xf32, #tpu.memory_space<vmem>>, vector<4x256xf32>
    tpu.vector_store %arg8[%c0_9, %c0_10], %18 {strides = array<i32>} : memref<36x256xf32, #tpu.memory_space<vmem>>, vector<4x256xf32>,
    %cst_11 = arith.constant 0.000000e+00 : f32
    %20 = vector.broadcast %cst_11 : f32 to vector<4x32xf32>
    %21 = vector.extract_strided_slice %8 {offsets = [0, 0], sizes = [4, 224], strides = [1, 1]} : vector<4x256xf32> to vector<4x224xf32>
    %22 = tpu.concatenate %20, %21 in 1 : vector<4x32xf32>, vector<4x224xf32> -> vector<4x256xf32>
    %c4 = arith.constant 4 : index
    %c0_12 = arith.constant 0 : index
    %23 = vector.load %arg8[%c4, %c0_12] : memref<36x256xf32, #tpu.memory_space<vmem>>, vector<4x256xf32>
    tpu.vector_store %arg8[%c4, %c0_12], %22 {strides = array<i32>} : memref<36x256xf32, #tpu.memory_space<vmem>>, vector<4x256xf32>,
    %cst_13 = arith.constant 0.000000e+00 : f32
    %24 = vector.broadcast %cst_13 : f32 to vector<4x30xf32>
    %25 = vector.extract_strided_slice %12 {offsets = [0, 0], sizes = [4, 226], strides = [1, 1]} : vector<4x256xf32> to vector<4x226xf32>
    %26 = tpu.concatenate %24, %25 in 1 : vector<4x30xf32>, vector<4x226xf32> -> vector<4x256xf32>
    %c8 = arith.constant 8 : index
    %c0_14 = arith.constant 0 : index
    %27 = vector.load %arg8[%c8, %c0_14] : memref<36x256xf32, #tpu.memory_space<vmem>>, vector<4x256xf32>
    tpu.vector_store %arg8[%c8, %c0_14], %26 {strides = array<i32>} : memref<36x256xf32, #tpu.memory_space<vmem>>, vector<4x256xf32>,
    %cst_15 = arith.constant 0.000000e+00 : f32
    %28 = vector.broadcast %cst_15 : f32 to vector<4x2xf32>
    %29 = vector.extract_strided_slice %15 {offsets = [0, 0], sizes = [4, 254], strides = [1, 1]} : vector<4x256xf32> to vector<4x254xf32>
    %30 = tpu.concatenate %28, %29 in 1 : vector<4x2xf32>, vector<4x254xf32> -> vector<4x256xf32>
    %c12 = arith.constant 12 : index
    %c0_16 = arith.constant 0 : index
    %31 = vector.load %arg8[%c12, %c0_16] : memref<36x256xf32, #tpu.memory_space<vmem>>, vector<4x256xf32>
    tpu.vector_store %arg8[%c12, %c0_16], %30 {strides = array<i32>} : memref<36x256xf32, #tpu.memory_space<vmem>>, vector<4x256xf32>,
    %c16 = arith.constant 16 : index
    %c0_17 = arith.constant 0 : index
    %32 = vector.load %arg8[%c16, %c0_17] : memref<36x256xf32, #tpu.memory_space<vmem>>, vector<4x256xf32>
    tpu.vector_store %arg8[%c16, %c0_17], %8 {strides = array<i32>} : memref<36x256xf32, #tpu.memory_space<vmem>>, vector<4x256xf32>,
    %33 = vector.extract_strided_slice %12 {offsets = [0, 2], sizes = [4, 254], strides = [1, 1]} : vector<4x256xf32> to vector<4x254xf32>
    %cst_18 = arith.constant 0.000000e+00 : f32
    %34 = vector.broadcast %cst_18 : f32 to vector<4x2xf32>
    %35 = tpu.concatenate %33, %34 in 1 : vector<4x254xf32>, vector<4x2xf32> -> vector<4x256xf32>
    %c20 = arith.constant 20 : index
    %c0_19 = arith.constant 0 : index
    %36 = vector.load %arg8[%c20, %c0_19] : memref<36x256xf32, #tpu.memory_space<vmem>>, vector<4x256xf32>
    tpu.vector_store %arg8[%c20, %c0_19], %35 {strides = array<i32>} : memref<36x256xf32, #tpu.memory_space<vmem>>, vector<4x256xf32>,
    %37 = vector.extract_strided_slice %15 {offsets = [0, 30], sizes = [4, 226], strides = [1, 1]} : vector<4x256xf32> to vector<4x226xf32>
    %cst_20 = arith.constant 0.000000e+00 : f32
    %38 = vector.broadcast %cst_20 : f32 to vector<4x30xf32>
    %39 = tpu.concatenate %37, %38 in 1 : vector<4x226xf32>, vector<4x30xf32> -> vector<4x256xf32>
    %c24 = arith.constant 24 : index
    %c0_21 = arith.constant 0 : index
    %40 = vector.load %arg8[%c24, %c0_21] : memref<36x256xf32, #tpu.memory_space<vmem>>, vector<4x256xf32>
    tpu.vector_store %arg8[%c24, %c0_21], %39 {strides = array<i32>} : memref<36x256xf32, #tpu.memory_space<vmem>>, vector<4x256xf32>,
    %41 = vector.extract_strided_slice %8 {offsets = [0, 32], sizes = [4, 224], strides = [1, 1]} : vector<4x256xf32> to vector<4x224xf32>
    %cst_22 = arith.constant 0.000000e+00 : f32
    %42 = vector.broadcast %cst_22 : f32 to vector<4x32xf32>
    %43 = tpu.concatenate %41, %42 in 1 : vector<4x224xf32>, vector<4x32xf32> -> vector<4x256xf32>
    %c28 = arith.constant 28 : index
    %c0_23 = arith.constant 0 : index
    %44 = vector.load %arg8[%c28, %c0_23] : memref<36x256xf32, #tpu.memory_space<vmem>>, vector<4x256xf32>
    tpu.vector_store %arg8[%c28, %c0_23], %43 {strides = array<i32>} : memref<36x256xf32, #tpu.memory_space<vmem>>, vector<4x256xf32>,
    %45 = vector.extract_strided_slice %12 {offsets = [0, 34], sizes = [4, 222], strides = [1, 1]} : vector<4x256xf32> to vector<4x222xf32>
    %cst_24 = arith.constant 0.000000e+00 : f32
    %46 = vector.broadcast %cst_24 : f32 to vector<4x34xf32>
    %47 = tpu.concatenate %45, %46 in 1 : vector<4x222xf32>, vector<4x34xf32> -> vector<4x256xf32>
    %c32 = arith.constant 32 : index
    %c0_25 = arith.constant 0 : index
    %48 = vector.load %arg8[%c32, %c0_25] : memref<36x256xf32, #tpu.memory_space<vmem>>, vector<4x256xf32>
    tpu.vector_store %arg8[%c32, %c0_25], %47 {strides = array<i32>} : memref<36x256xf32, #tpu.memory_space<vmem>>, vector<4x256xf32>,
    %c0_26 = arith.constant 0 : index
    %c0_27 = arith.constant 0 : index
    %c0_28 = arith.constant 0 : index
    %49 = vector.load %arg5[%c0_26, %c0_27, %c0_28] : memref<1x4x36xf32, #tpu.memory_space<vmem>>, vector<1x4x36xf32>
    %50 = vector.shape_cast %49 : vector<1x4x36xf32> to vector<4x36xf32>
    %c0_29 = arith.constant 0 : index
    %c0_30 = arith.constant 0 : index
    %51 = vector.load %arg8[%c0_29, %c0_30] : memref<36x256xf32, #tpu.memory_space<vmem>>, vector<36x256xf32>
    %cst_31 = arith.constant dense<0.000000e+00> : vector<4x256xf32>
    %52 = tpu.matmul %50, %51, %cst_31 {dimension_numbers = #tpu.dot_dimension_numbers<[1], [0], [0], [1], [0, 0, 1, 1], [], []>} : vector<4x36xf32>, vector<36x256xf32>, vector<4x256xf32> -> vector<4x256xf32>
    %c0_32 = arith.constant 0 : index
    %c0_33 = arith.constant 0 : index
    %c0_34 = arith.constant 0 : index
    %53 = vector.load %arg6[%c0_32, %c0_33, %c0_34] : memref<1x4x1xf32, #tpu.memory_space<vmem>>, vector<1x4x1xf32>
    %54 = vector.shape_cast %53 : vector<1x4x1xf32> to vector<4x1xf32>
    %55 = vector.broadcast %54 : vector<4x1xf32> to vector<4x256xf32>
    %56 = arith.addf %52, %55 : vector<4x256xf32>
    %c0_35 = arith.constant 0 : index
    %c0_36 = arith.constant 0 : index
    %c0_37 = arith.constant 0 : index
    %c0_38 = arith.constant 0 : index
    %57 = vector.load %arg7[%c0_35, %c0_36, %c0_37, %c0_38] : memref<1x1x4x256xf32, #tpu.memory_space<vmem>>, vector<1x1x4x256xf32>
    %58 = vector.shape_cast %57 : vector<1x1x4x256xf32> to vector<4x256xf32>
    %59 = vector.shape_cast %56 : vector<4x256xf32> to vector<1x1x4x256xf32>
    tpu.vector_store %arg7[%c0_35, %c0_36, %c0_37, %c0_38], %59 {strides = array<i32>} : memref<1x1x4x256xf32, #tpu.memory_space<vmem>>, vector<1x1x4x256xf32>,
    return
  }
  func.func @transform_0(%arg0: i32, %arg1: i32) -> (i32, i32, i32, i32) {
    %c0_i32 = arith.constant 0 : i32
    %c0_i32_0 = arith.constant 0 : i32
    %c0_i32_1 = arith.constant 0 : i32
    return %arg0, %arg1, %c0_i32, %c0_i32_0 : i32, i32, i32, i32
  }
  func.func @transform_1(%arg0: i32, %arg1: i32) -> (i32, i32) {
    %c0_i32 = arith.constant 0 : i32
    %c0_i32_0 = arith.constant 0 : i32
    %c0_i32_1 = arith.constant 0 : i32
    return %c0_i32, %c0_i32_0 : i32, i32
  }
  func.func @transform_2(%arg0: i32, %arg1: i32) -> (i32, i32, i32) {
    %c0_i32 = arith.constant 0 : i32
    %c0_i32_0 = arith.constant 0 : i32
    %c0_i32_1 = arith.constant 0 : i32
    return %arg0, %c0_i32, %c0_i32_0 : i32, i32, i32
  }
  func.func @transform_3(%arg0: i32, %arg1: i32) -> (i32, i32, i32) {
    %c0_i32 = arith.constant 0 : i32
    %c0_i32_0 = arith.constant 0 : i32
    %c0_i32_1 = arith.constant 0 : i32
    return %arg0, %c0_i32, %c0_i32_0 : i32, i32, i32
  }
  func.func @transform_4(%arg0: i32, %arg1: i32) -> (i32, i32, i32) {
    %c0_i32 = arith.constant 0 : i32
    %c0_i32_0 = arith.constant 0 : i32
    %c0_i32_1 = arith.constant 0 : i32
    return %arg0, %c0_i32, %c0_i32_0 : i32, i32, i32
  }
  func.func @transform_5(%arg0: i32, %arg1: i32) -> (i32, i32, i32, i32) {
    %c0_i32 = arith.constant 0 : i32
    %c0_i32_0 = arith.constant 0 : i32
    %c0_i32_1 = arith.constant 0 : i32
    return %arg0, %arg1, %c0_i32, %c0_i32_0 : i32, i32, i32, i32
  }
}

</mosaic_0001>

<llo_original>
// kernel: tpu_custom_call.1
$region0: #{tpu_custom_call.1}
  #allocation0 [shape = 'u32[]', space=smem, size = 0x4, offset = 0x4, fixed_abs, tag = 'smem constant byte address 0x4 - core index']
  #allocation1 [shape = 'u32[144,128]{1,0:T(1,128)}', space=vmem, size = 0x12000, scoped, tag = 'internal scratch']
  #allocation2 [shape = 'f32[36,256]{1,0:T(8,128)}', space=vmem, size = 0xa000, scoped, tag = 'scratch operand']
  %s0 = inlined_call_operand.hbm [shape: f32[3,2,4,256], index: 0, kind: input, shape index: {}]
  %s1 = inlined_call_operand.vmem [shape: f32[2,256], index: 1, kind: input, shape index: {}]
  %s2 = inlined_call_operand.vmem [shape: f32[3,4,1], index: 2, kind: input, shape index: {}]
  %s3 = inlined_call_operand.vmem [shape: f32[3,4,36], index: 3, kind: input, shape index: {}]
  %s4 = inlined_call_operand.vmem [shape: f32[3,4,1], index: 4, kind: input, shape index: {}]
  %s5 = inlined_call_operand.hbm [shape: f32[3,2,4,256], index: 5, kind: output, shape index: {}]
  %s6 = sld [smem:[#allocation0]]
  $region57: #{tpu_custom_call.1} parent=0
    _
  %s8 = ssub.s32 1, %s6
  %s9 = scalar_select 0, %s8, %s6
  $region1: #{tpu_custom_call.1} parent=0
    #allocation3 [shape = 'u8[8192]{0}', space=vmem, size = 0x2000, scoped, tag = 'input window, operand 0']
    #allocation4 [shape = 's32[2]{0}', space=sflag, size = 0x8, scoped, tag = 'scoped memory for tpu_custom_call.1']
    #allocation5 [shape = 's32[2]{0}', space=sflag, size = 0x8, scoped, tag = 'scoped memory for tpu_custom_call.1']
    #allocation6 [shape = 'u8[8192]{0}', space=vmem, size = 0x2000, scoped, tag = 'output window, operand 0']
    %10 = vsyncpa [#allocation4], 0
    %s11 = scalar_lea.sflag [#allocation4], 1
    %12 = vsyncpa %s11, 0
    %13 = vsyncpa [#allocation5], 0
    %s14 = scalar_lea.sflag [#allocation5], 1
    %15 = vsyncpa %s14, 0
    loop: start=0, step=1, limit=8
    $region2: #{tpu_custom_call.1} parent=1 // loop_pre_header
      _
    $region3: #{tpu_custom_call.1} parent=1 // loop_header
      %s17 = sphi 0, %s21
      %p18 = scmp.ge.s32.totalorder %s17, 8
      %s24 = sphi 0, %s36
      %s25 = sphi 0, %s32
      %s26 = sphi 0, %s24
      %s27 = sphi 0, %s25
      %s28 = sphi 0, %s26
      %s29 = sphi 0, %s27
      %s41 = sphi 0, %s43
      %s44 = sphi 0, %s41
      %s45 = sphi 0, %s44
      %s61 = sphi 0, %s45
      %s65 = sphi 0, %s65
      %s67 = sphi 0, %s65
      %s68 = sphi 0, %s67
      %s82 = sphi 0, %s68
      %s88 = sphi 0, %s90
      %s91 = sphi 0, %s88
      %s92 = sphi 0, %s91
      %s108 = sphi 0, %s92
      %s114 = sphi 0, %s116
      %s117 = sphi 0, %s114
      %s118 = sphi 0, %s117
      %s134 = sphi 0, %s118
      %s140 = sphi 0, %s142
      %s143 = sphi 0, %s140
      %s144 = sphi 0, %s143
      %s160 = sphi 0, %s144
      %s168 = sphi 0, %s170
      %s171 = sphi 0, %s168
      %s172 = sphi 0, %s171
      %s188 = sphi 0, %s172
    $region4: #{tpu_custom_call.1} parent=1 // loop_header_branch
      %20 = sbr.rel (%p18) target = $region8
    $region5: #{tpu_custom_call.1} parent=1 // loop_body
      %s22 = ssub.s32 %s17, 1
      %s23 = ssub.s32 %s17, 2
      %s30 = sadd.s32 1, %s25
      %p31 = scmp.ge.s32.totalorder %s30, 2
      %s32 = scalar_select %p31, 0, %s30
      %s33 = sadd.s32 1, %s24
      %s34 = scalar_select %p31, %s33, %s24
      %p35 = scmp.ge.s32.totalorder %s34, 3
      %s36 = scalar_select %p35, 0, %s34
      %s37 = ssub.s32 %s24, %s36
      %s38 = ssub.s32 %s25, %s32
      %s39 = sor.u32 %s37, %s38
      %p40 = scmp.eq.s32.totalorder %s39, 0
      %s42 = sadd.s32 %s41, 1
      %s43 = scalar_select %p40, %s41, %s42
      %p46 = pneg %p40
      %p47 = scmp.eq.s32.totalorder %s17, 5
      %p48 = por %p46, %p47
      %p49 = scmp.ne.s32.totalorder %s41, %s44
      %p50 = scmp.eq.s32.totalorder %s17, 0
      %p51 = por %p49, %p50
      %p52 = scmp.ne.s32.totalorder %s41, %s44
      %p53 = scmp.eq.s32.totalorder %s22, 5
      %p54 = por %p52, %p53
      %p55 = scmp.ne.s32.totalorder %s44, %s45
      %p56 = scmp.eq.s32.totalorder %s22, 0
      %p57 = por %p55, %p56
      %p58 = scmp.ne.s32.totalorder %s44, %s45
      %p59 = scmp.eq.s32.totalorder %s23, 5
      %p60 = por %p58, %p59
      %p62 = scmp.ne.s32.totalorder %s45, %s61
      %p63 = scmp.eq.s32.totalorder %s23, 0
      %p64 = por %p62, %p63
      %s66 = sadd.s32 %s65, 1
      %p69 = scmp.eq.s32.totalorder %s17, 5
      %p70 = scmp.ne.s32.totalorder %s65, %s67
      %p71 = scmp.eq.s32.totalorder %s17, 0
      %p72 = por %p70, %p71
      %p73 = scmp.ne.s32.totalorder %s65, %s67
      %p74 = scmp.eq.s32.totalorder %s22, 5
      %p75 = por %p73, %p74
      %p76 = scmp.ne.s32.totalorder %s67, %s68
      %p77 = scmp.eq.s32.totalorder %s22, 0
      %p78 = por %p76, %p77
      %p79 = scmp.ne.s32.totalorder %s67, %s68
      %p80 = scmp.eq.s32.totalorder %s23, 5
      %p81 = por %p79, %p80
      %p83 = scmp.ne.s32.totalorder %s68, %s82
      %p84 = scmp.eq.s32.totalorder %s23, 0
      %p85 = por %p83, %p84
      %s86 = ssub.s32 %s24, %s36
      %p87 = scmp.eq.s32.totalorder %s86, 0
      %s89 = sadd.s32 %s88, 1
      %s90 = scalar_select %p87, %s88, %s89
      %p93 = pneg %p87
      %p94 = scmp.eq.s32.totalorder %s17, 5
      %p95 = por %p93, %p94
      %p96 = scmp.ne.s32.totalorder %s88, %s91
      %p97 = scmp.eq.s32.totalorder %s17, 0
      %p98 = por %p96, %p97
      %p99 = scmp.ne.s32.totalorder %s88, %s91
      %p100 = scmp.eq.s32.totalorder %s22, 5
      %p101 = por %p99, %p100
      %p102 = scmp.ne.s32.totalorder %s91, %s92
      %p103 = scmp.eq.s32.totalorder %s22, 0
      %p104 = por %p102, %p103
      %p105 = scmp.ne.s32.totalorder %s91, %s92
      %p106 = scmp.eq.s32.totalorder %s23, 5
      %p107 = por %p105, %p106
      %p109 = scmp.ne.s32.totalorder %s92, %s108
      %p110 = scmp.eq.s32.totalorder %s23, 0
      %p111 = por %p109, %p110
      %s112 = ssub.s32 %s24, %s36
      %p113 = scmp.eq.s32.totalorder %s112, 0
      %s115 = sadd.s32 %s114, 1
      %s116 = scalar_select %p113, %s114, %s115
      %p119 = pneg %p113
      %p120 = scmp.eq.s32.totalorder %s17, 5
      %p121 = por %p119, %p120
      %p122 = scmp.ne.s32.totalorder %s114, %s117
      %p123 = scmp.eq.s32.totalorder %s17, 0
      %p124 = por %p122, %p123
      %p125 = scmp.ne.s32.totalorder %s114, %s117
      %p126 = scmp.eq.s32.totalorder %s22, 5
      %p127 = por %p125, %p126
      %p128 = scmp.ne.s32.totalorder %s117, %s118
      %p129 = scmp.eq.s32.totalorder %s22, 0
      %p130 = por %p128, %p129
      %p131 = scmp.ne.s32.totalorder %s117, %s118
      %p132 = scmp.eq.s32.totalorder %s23, 5
      %p133 = por %p131, %p132
      %p135 = scmp.ne.s32.totalorder %s118, %s134
      %p136 = scmp.eq.s32.totalorder %s23, 0
      %p137 = por %p135, %p136
      %s138 = ssub.s32 %s24, %s36
      %p139 = scmp.eq.s32.totalorder %s138, 0
      %s141 = sadd.s32 %s140, 1
      %s142 = scalar_select %p139, %s140, %s141
      %p145 = pneg %p139
      %p146 = scmp.eq.s32.totalorder %s17, 5
      %p147 = por %p145, %p146
      %p148 = scmp.ne.s32.totalorder %s140, %s143
      %p149 = scmp.eq.s32.totalorder %s17, 0
      %p150 = por %p148, %p149
      %p151 = scmp.ne.s32.totalorder %s140, %s143
      %p152 = scmp.eq.s32.totalorder %s22, 5
      %p153 = por %p151, %p152
      %p154 = scmp.ne.s32.totalorder %s143, %s144
      %p155 = scmp.eq.s32.totalorder %s22, 0
      %p156 = por %p154, %p155
      %p157 = scmp.ne.s32.totalorder %s143, %s144
      %p158 = scmp.eq.s32.totalorder %s23, 5
      %p159 = por %p157, %p158
      %p161 = scmp.ne.s32.totalorder %s144, %s160
      %p162 = scmp.eq.s32.totalorder %s23, 0
      %p163 = por %p161, %p162
      %s164 = ssub.s32 %s24, %s36
      %s165 = ssub.s32 %s25, %s32
      %s166 = sor.u32 %s164, %s165
      %p167 = scmp.eq.s32.totalorder %s166, 0
      %s169 = sadd.s32 %s168, 1
      %s170 = scalar_select %p167, %s168, %s169
      %p173 = pneg %p167
      %p174 = scmp.eq.s32.totalorder %s17, 5
      %p175 = por %p173, %p174
      %p176 = scmp.ne.s32.totalorder %s168, %s171
      %p177 = scmp.eq.s32.totalorder %s17, 0
      %p178 = por %p176, %p177
      %p179 = scmp.ne.s32.totalorder %s168, %s171
      %p180 = scmp.eq.s32.totalorder %s22, 5
      %p181 = por %p179, %p180
      %p182 = scmp.ne.s32.totalorder %s171, %s172
      %p183 = scmp.eq.s32.totalorder %s22, 0
      %p184 = por %p182, %p183
      %p185 = scmp.ne.s32.totalorder %s171, %s172
      %p186 = scmp.eq.s32.totalorder %s23, 5
      %p187 = por %p185, %p186
      %p189 = scmp.ne.s32.totalorder %s172, %s188
      %p190 = scmp.eq.s32.totalorder %s23, 0
      %p191 = por %p189, %p190
      %p192 = scmp.le.s32.totalorder 1, %s17
      %p193 = scmp.lt.s32.totalorder %s17, 7
      %p194 = pnand %p192, %p193
      %p195 = pneg %p194
      // Predicated region
      $region9: #{tpu_custom_call.1} parent=5 // pred_check
        _
      $region10: #{tpu_custom_call.1} parent=5 // pred_check_branch
        %197 = sbr.rel (%p194) target = $region12
      $region11: #{tpu_custom_call.1} parent=5 // pred_region
        %s198 = ssub.s32 %s17, 1
        // Predicated region
        $region13: #{tpu_custom_call.1} parent=11 // pred_check
          %p199 = pneg %p78
        $region14: #{tpu_custom_call.1} parent=11 // pred_check_branch
          %201 = sbr.rel (%p199) target = $region16
        $region15: #{tpu_custom_call.1} parent=11 // pred_region
          _
        $region16: #{tpu_custom_call.1} parent=11 // pred_fallthru
          _
      $region12: #{tpu_custom_call.1} parent=5 // pred_fallthru
        _
      %p202 = scmp.lt.s32.totalorder %s17, 6
      // Predicated region
      $region17: #{tpu_custom_call.1} parent=5 // pred_check
        %p203 = pneg %p202
      $region18: #{tpu_custom_call.1} parent=5 // pred_check_branch
        %205 = sbr.rel (%p203) target = $region20
      $region19: #{tpu_custom_call.1} parent=5 // pred_region
        // Predicated region
        $region21: #{tpu_custom_call.1} parent=19 // pred_check
          %p206 = pneg %p51
        $region22: #{tpu_custom_call.1} parent=19 // pred_check_branch
          %208 = sbr.rel (%p206) target = $region24
        $region23: #{tpu_custom_call.1} parent=19 // pred_region
          %s209 = sand.u32 %s41, 1
          %s210 = scalar_lea.sflag [#allocation4], %s209
          %s211 = sand.u32 %s41, 1
          %s212 = smul.addr %s211, 8
          %s213 = scalar_lea.vmem [#allocation3], %s212
          %s215 = ssub.s32 128, 128
          %216 = vsyncadd %s210, %s215
          %s217 = smul.addr %s25, 2
          %s218 = smul.addr %s24, 4
          %s219 = sadd.s32 %s217, %s218
          %s220 = smul.addr %s219, 64
          %s221 = scalar_lea.hbm %s0, %s220
          %s223 = sshll.u32 %s213, 4
          %s224 = int_to_ptr.vmem [resolvable:$true] %s223
          %226 = dma.hbm_to_vmem [thread:$0]  %s221, 128, %s224, %s210
        $region24: #{tpu_custom_call.1} parent=19 // pred_fallthru
          _
        // Predicated region
        $region25: #{tpu_custom_call.1} parent=19 // pred_check
          %p227 = pneg %p98
        $region26: #{tpu_custom_call.1} parent=19 // pred_check_branch
          %229 = sbr.rel (%p227) target = $region28
        $region27: #{tpu_custom_call.1} parent=19 // pred_region
          %p230 = scmp.lt.s32.totalorder %s24, 2
          %s231 = scalar_select %p230, %s24, 2
          %s232 = smul.addr %s231, 4
          %s233 = scalar_lea.vmem %s2, %s232
        $region28: #{tpu_custom_call.1} parent=19 // pred_fallthru
          _
        // Predicated region
        $region29: #{tpu_custom_call.1} parent=19 // pred_check
          %p234 = pneg %p124
        $region30: #{tpu_custom_call.1} parent=19 // pred_check_branch
          %236 = sbr.rel (%p234) target = $region32
        $region31: #{tpu_custom_call.1} parent=19 // pred_region
          %p237 = scmp.lt.s32.totalorder %s24, 2
          %s238 = scalar_select %p237, %s24, 2
          %s239 = smul.addr %s238, 4
          %s240 = scalar_lea.vmem %s3, %s239
        $region32: #{tpu_custom_call.1} parent=19 // pred_fallthru
          _
        // Predicated region
        $region33: #{tpu_custom_call.1} parent=19 // pred_check
          %p241 = pneg %p150
        $region34: #{tpu_custom_call.1} parent=19 // pred_check_branch
          %243 = sbr.rel (%p241) target = $region36
        $region35: #{tpu_custom_call.1} parent=19 // pred_region
          %p244 = scmp.lt.s32.totalorder %s24, 2
          %s245 = scalar_select %p244, %s24, 2
          %s246 = smul.addr %s245, 4
          %s247 = scalar_lea.vmem %s4, %s246
        $region36: #{tpu_custom_call.1} parent=19 // pred_fallthru
          _
      $region20: #{tpu_custom_call.1} parent=5 // pred_fallthru
        _
      %p248 = scmp.le.s32.totalorder 1, %s17
      %p249 = scmp.lt.s32.totalorder %s17, 7
      %p250 = pnand %p248, %p249
      %p251 = pneg %p250
      // Predicated region
      $region37: #{tpu_custom_call.1} parent=5 // pred_check
        _
      $region38: #{tpu_custom_call.1} parent=5 // pred_check_branch
        %253 = sbr.rel (%p250) target = $region40
      $region39: #{tpu_custom_call.1} parent=5 // pred_region
        %s254 = ssub.s32 %s17, 1
        %s255 = sand.u32 %s44, 1
        %s256 = scalar_lea.sflag [#allocation4], %s255
        %s257 = sand.u32 %s44, 1
        %s258 = smul.addr %s257, 8
        %s259 = scalar_lea.vmem [#allocation3], %s258
        // Predicated region
        $region41: #{tpu_custom_call.1} parent=39 // pred_check
          %p260 = pneg %p57
        $region42: #{tpu_custom_call.1} parent=39 // pred_check_branch
          %262 = sbr.rel (%p260) target = $region44
        $region43: #{tpu_custom_call.1} parent=39 // pred_region
          %263 = dma.done %s256, 128
        $region44: #{tpu_custom_call.1} parent=39 // pred_fallthru
          _
        %s264 = sand.u32 %s44, 1
        %s265 = scalar_lea.sflag [#allocation4], %s264
        %s266 = sand.u32 %s44, 1
        %s267 = smul.addr %s266, 8
        %s268 = scalar_lea.vmem [#allocation3], %s267
        %p269 = pneg %p57
        %p270 = pneg %p54
        %p271 = pneg %p78
        %p272 = pneg %p75
        %p273 = scmp.lt.s32.totalorder %s26, 2
        %s274 = scalar_select %p273, %s26, 2
        %s275 = smul.addr %s274, 4
        %s276 = scalar_lea.vmem %s2, %s275
        %p277 = pneg %p104
        %p278 = pneg %p101
        %p279 = scmp.lt.s32.totalorder %s26, 2
        %s280 = scalar_select %p279, %s26, 2
        %s281 = smul.addr %s280, 4
        %s282 = scalar_lea.vmem %s3, %s281
        %p283 = pneg %p130
        %p284 = pneg %p127
        %p285 = scmp.lt.s32.totalorder %s26, 2
        %s286 = scalar_select %p285, %s26, 2
        %s287 = smul.addr %s286, 4
        %s288 = scalar_lea.vmem %s4, %s287
        %p289 = pneg %p156
        %p290 = pneg %p153
        %p291 = pneg %p184
        %p292 = pneg %p181
        %s293 = sand.u32 %s171, 1
        %s294 = scalar_lea.sflag [#allocation5], %s293
        %s295 = sand.u32 %s171, 1
        %s296 = smul.addr %s295, 8
        %s297 = scalar_lea.vmem [#allocation6], %s296
        %p298 = scmp.lt.s32.totalorder %s26, 2
        %s299 = scalar_select %p298, %s26, 2
        %s300 = smul.addr %s299, 4
        %s301 = scalar_lea.vmem %s2, %s300
        %p302 = scmp.lt.s32.totalorder %s26, 2
        %s303 = scalar_select %p302, %s26, 2
        %s304 = smul.addr %s303, 4
        %s305 = scalar_lea.vmem %s3, %s304
        %p306 = scmp.lt.s32.totalorder %s26, 2
        %s307 = scalar_select %p306, %s26, 2
        %s308 = smul.addr %s307, 4
        %s309 = scalar_lea.vmem %s4, %s308
        %v310 = vld [vmem:[%s259] sm:$0xff]
        %v311 = vld [vmem:[%s301] sm:$0xf]
        %vm312 = vcmp.ge.f32.partialorder %v310, 0.0
        %314 = vset.pattern.permute.xlu0 0
        %315 = vperm.xlu0 %314, %v311
        %v316 = vpop.permute.xlu0 %315
        %v319 = vcombine.high %v310, %v310
        %v321 = vmul.f32 %v316, %v310
        %v322 = vmul.f32 %v316, %v319
        %v325 = vcombine.low %v321, %v322
        %v327 = vsel %vm312, %v310, %v325
        %v328 = vld [vmem:[%s1] sm:$0xf]
        %v330 = vlaneseq
        %v331 = vshrl.u32 %v330, 7
        %v332 = vsub.s32 0, %v331
        %v333 = vrot.slane %v328, %v332
        %v334 = vlaneseq
        %v335 = vshrl.u32 %v334, 7
        %v336 = vsub.s32 2, %v335
        %v337 = vrot.slane %v328, %v336
        %v340 = vlaneseq
        %v341 = vshrl.u32 %v340, 7
        %v342 = vsub.s32 0, %v341
        %v343 = vrot.slane %v333, %v342
        %v344 = vlaneseq
        %v345 = vshrl.u32 %v344, 7
        %v346 = vsub.s32 0, %v345
        %v347 = vrot.slane %v337, %v346
        %v350 = vcombine.low %v343, %v347
        %v352 = vmul.f32 %v327, %v350
        %v353 = vlaneseq
        %v354 = vshrl.u32 %v353, 7
        %v355 = vsub.s32 1, %v354
        %v356 = vrot.slane %v328, %v355
        %v357 = vlaneseq
        %v358 = vshrl.u32 %v357, 7
        %v359 = vsub.s32 3, %v358
        %v360 = vrot.slane %v328, %v359
        %v363 = vlaneseq
        %v364 = vshrl.u32 %v363, 7
        %v365 = vsub.s32 1, %v364
        %v366 = vrot.slane %v356, %v365
        %v367 = vlaneseq
        %v368 = vshrl.u32 %v367, 7
        %v369 = vsub.s32 1, %v368
        %v370 = vrot.slane %v360, %v369
        %v373 = vcombine.low %v366, %v370
        %v375 = vmul.f32 %v327, %v373
        %v377 = vcombine.high %v375, %v375
        %378 = vrot.lane.b32.xlu0 %v375, 34
        %v379 = vpop.permute.xlu0 %378
        %380 = vrot.lane.b32.xlu0 %v377, 34
        %v381 = vpop.permute.xlu0 %380
        %vm382 = vcmask 277504
        %v383 = vsel %vm382, %v379, %v381
        %v386 = vsel %vm382, 0.0, %v379
        %387 = vst [vmem:[#allocation2] sm:$0xf] %v386
        %388 = vst [vmem:[#allocation2 + $0x8] sm:$0xf] %v383
        %v390 = vcombine.high %v327, %v327
        %391 = vrot.lane.b32.xlu0 %v327, 32
        %v392 = vpop.permute.xlu0 %391
        %393 = vrot.lane.b32.xlu0 %v390, 32
        %v394 = vpop.permute.xlu0 %393
        %vm395 = vcmask 261120
        %v396 = vsel %vm395, %v392, %v394
        %v398 = vsel %vm395, 0.0, %v392
        %v400 = vrot.slane %v398, 4
        %v401 = vrot.slane %v396, 4
        %404 = vst [vmem:[#allocation2] sm:$0xf0] %v400
        %405 = vst [vmem:[#allocation2 + $0x8] sm:$0xf0] %v401
        %v407 = vcombine.high %v352, %v352
        %408 = vrot.lane.b32.xlu0 %v352, 30
        %v409 = vpop.permute.xlu0 %408
        %410 = vrot.lane.b32.xlu0 %v407, 30
        %v411 = vpop.permute.xlu0 %410
        %vm412 = vcmask 244736
        %v413 = vsel %vm412, %v409, %v411
        %v416 = vsel %vm412, 0.0, %v409
        %417 = vst [vmem:[#allocation2 + $0x10] sm:$0xf] %v416
        %418 = vst [vmem:[#allocation2 + $0x18] sm:$0xf] %v413
        %419 = vrot.lane.b32.xlu0 %v375, 2
        %v420 = vpop.permute.xlu0 %419
        %421 = vrot.lane.b32.xlu0 %v377, 2
        %v422 = vpop.permute.xlu0 %421
        %vm423 = vcmask 15360
        %v424 = vsel %vm423, %v420, %v422
        %v426 = vsel %vm423, 0.0, %v420
        %v428 = vrot.slane %v426, 4
        %v429 = vrot.slane %v424, 4
        %432 = vst [vmem:[#allocation2 + $0x10] sm:$0xf0] %v428
        %433 = vst [vmem:[#allocation2 + $0x18] sm:$0xf0] %v429
        %435 = vst [vmem:[#allocation2 + $0x20] sm:$0xf] %v327
        %436 = vst [vmem:[#allocation2 + $0x28] sm:$0xf] %v390
        %437 = vrot.lane.b32.xlu0 %v352, 126
        %v438 = vpop.permute.xlu0 %437
        %439 = vrot.lane.b32.xlu0 %v407, 126
        %v440 = vpop.permute.xlu0 %439
        %vm441 = vcmask 1031168
        %v442 = vsel %vm441, %v438, %v440
        %v444 = vsel %vm441, %v440, 0.0
        %v446 = vrot.slane %v442, 4
        %v447 = vrot.slane %v444, 4
        %450 = vst [vmem:[#allocation2 + $0x20] sm:$0xf0] %v446
        %451 = vst [vmem:[#allocation2 + $0x28] sm:$0xf0] %v447
        %452 = vrot.lane.b32.xlu0 %v375, 98
        %v453 = vpop.permute.xlu0 %452
        %454 = vrot.lane.b32.xlu0 %v377, 98
        %v455 = vpop.permute.xlu0 %454
        %vm456 = vcmask 801792
        %v457 = vsel %vm456, %v453, %v455
        %v460 = vsel %vm456, %v455, 0.0
        %461 = vst [vmem:[#allocation2 + $0x30] sm:$0xf] %v457
        %462 = vst [vmem:[#allocation2 + $0x38] sm:$0xf] %v460
        %463 = vrot.lane.b32.xlu0 %v327, 96
        %v464 = vpop.permute.xlu0 %463
        %465 = vrot.lane.b32.xlu0 %v390, 96
        %v466 = vpop.permute.xlu0 %465
        %vm467 = vcmask 785408
        %v468 = vsel %vm467, %v464, %v466
        %v470 = vsel %vm467, %v466, 0.0
        %v472 = vrot.slane %v468, 4
        %v473 = vrot.slane %v470, 4
        %476 = vst [vmem:[#allocation2 + $0x30] sm:$0xf0] %v472
        %477 = vst [vmem:[#allocation2 + $0x38] sm:$0xf0] %v473
        %478 = vrot.lane.b32.xlu0 %v352, 94
        %v479 = vpop.permute.xlu0 %478
        %480 = vrot.lane.b32.xlu0 %v407, 94
        %v481 = vpop.permute.xlu0 %480
        %vm482 = vcmask 769024
        %v483 = vsel %vm482, %v479, %v481
        %v486 = vsel %vm482, %v481, 0.0
        %487 = vst [vmem:[#allocation2 + $0x40] sm:$0xf] %v483
        %488 = vst [vmem:[#allocation2 + $0x48] sm:$0xf] %v486
        %v489 = vld [vmem:[%s305] sm:$0xf]
        %v490 = vld [vmem:[#allocation2] sm:$0xff]
        %v491 = vld [vmem:[#allocation2 + $0x8] sm:$0xff]
        %v492 = vld [vmem:[#allocation2 + $0x10] sm:$0xff]
        %v493 = vld [vmem:[#allocation2 + $0x18] sm:$0xff]
        %v494 = vld [vmem:[#allocation2 + $0x20] sm:$0xff]
        %v495 = vld [vmem:[#allocation2 + $0x28] sm:$0xff]
        %v496 = vld [vmem:[#allocation2 + $0x30] sm:$0xff]
        %v497 = vld [vmem:[#allocation2 + $0x38] sm:$0xff]
        %v498 = vld [vmem:[#allocation2 + $0x40] sm:$0xf]
        %v499 = vld [vmem:[#allocation2 + $0x48] sm:$0xf]
        %v500 = vld [vmem:[%s309] sm:$0xf]
        %502 = vset.pattern.permute.xlu0 0
        %503 = vperm.xlu0 %502, %v500
        %v504 = vpop.permute.xlu0 %503
        %vm506 = vcmask 293888
        %v508 = vsel %vm506, %v489, 0
        %vm510 = vcmask 1043456
        %v512 = vsel %vm510, %v498, 0
        %v515 = vsel %vm510, %v499, 0
        %517 = vmatprep.subr.mxu0 %v491
        %518 = vmatpush1.msra.mxu0 %v490
        %519 = vmatprep.subr.mxu0 %v493
        %520 = vmatpush1.msra.mxu0 %v492
        %521 = vmatprep.subr.mxu0 %v495
        %522 = vmatpush1.msra.mxu0 %v494
        %523 = vmatprep.subr.mxu0 %v497
        %524 = vmatpush1.msra.mxu0 %v496
        %525 = vmatprep.subr.mxu0 %v515
        %526 = vmatpush1.msra.mxu0 %v512
        %527 = vmatprep.subr.mxu0 0.0
        %528 = vmatpush1.msra.mxu0 0.0
        %529 = vmatprep.subr.mxu0 0.0
        %530 = vmatpush1.msra.mxu0 0.0
        %531 = vmatprep.subr.mxu0 0.0
        %532 = vmatpush1.msra.mxu0 0.0
        %533 = vmatprep.subr.mxu0 0.0
        %534 = vmatpush1.msra.mxu0 0.0
        %535 = vmatprep.subr.mxu0 0.0
        %536 = vmatpush1.msra.mxu0 0.0
        %537 = vmatprep.subr.mxu0 0.0
        %538 = vmatpush1.msra.mxu0 0.0
        %539 = vmatprep.subr.mxu0 0.0
        %540 = vmatpush1.msra.mxu0 0.0
        %541 = vmatprep.subr.mxu0 0.0
        %542 = vmatpush1.msra.mxu0 0.0
        %543 = vmatprep.subr.mxu0 0.0
        %544 = vmatpush1.msra.mxu0 0.0
        %545 = vmatprep.subr.mxu0 0.0
        %546 = vmatpush1.msra.mxu0 0.0
        %547 = vmatprep.subr.mxu0 0.0
        %548 = vmatpush1.msra.mxu0 0.0
        %549 = vmatprep.subr.mxu0 0.0
        %550 = vmatpush1.msra.mxu0 0.0
        %551 = vmatprep.subr.mxu0 0.0
        %552 = vmatpush1.msra.mxu0 0.0
        %553 = vmatprep.subr.mxu0 0.0
        %554 = vmatpush1.msra.mxu0 0.0
        %555 = vmatprep.subr.mxu0 0.0
        %556 = vmatpush1.msra.mxu0 0.0
        %557 = vmatprep.subr.mxu0 0.0
        %558 = vmatpush1.msra.mxu0 0.0
        %559 = vmatprep.subr.mxu0 0.0
        %560 = vmatpush1.msra.mxu0 0.0
        %561 = vmatprep.subr.mxu0 0.0
        %562 = vmatpush1.msra.mxu0 0.0
        %563 = vmatprep.subr.mxu0 0.0
        %564 = vmatpush1.msra.mxu0 0.0
        %565 = vmatprep.subr.mxu0 0.0
        %566 = vmatpush1.msra.mxu0 0.0
        %567 = vmatprep.subr.mxu0 0.0
        %568 = vmatpush1.msra.mxu0 0.0
        %569 = vmatprep.subr.mxu0 0.0
        %570 = vmatpush1.msra.mxu0 0.0
        %571 = vmatprep.subr.mxu0 0.0
        %572 = vmatpush1.msra.mxu0 0.0
        %573 = vmatprep.subr.mxu0 0.0
        %574 = vmatpush1.msra.mxu0 0.0
        %575 = vmatprep.subr.mxu0 0.0
        %576 = vmatpush1.msra.mxu0 0.0
        %577 = vmatprep.subr.mxu0 0.0
        %578 = vmatpush1.msra.mxu0 0.0
        %579 = vmatprep.subr.mxu0 0.0
        %580 = vmatpush1.msra.mxu0 0.0
        %581 = vmatprep.mubr.f32.mxu0 0.0
        %582 = vmatmul.mubr.f32.gmra.mrb[0].mxu0 %v508
        %v583 = vpop.f32.mrb[0].mxu0
        %v584 = vadd.f32 %v504, %v583
        %v585 = vpop.f32.mrb[0].mxu0
        %v586 = vadd.f32 %v504, %v585
        %587 = vdwg.mxu0
        %v590 = vcombine.low %v584, %v586
        %592 = vst [vmem:[%s297] sm:$0xff] %v590
        %s593 = sand.u32 %s171, 1
        %s594 = scalar_lea.sflag [#allocation5], %s593
        %s595 = sand.u32 %s171, 1
        %s596 = smul.addr %s595, 8
        %s597 = scalar_lea.vmem [#allocation6], %s596
        // Predicated region
        $region45: #{tpu_custom_call.1} parent=39 // pred_check
          %p598 = pneg %p181
        $region46: #{tpu_custom_call.1} parent=39 // pred_check_branch
          %600 = sbr.rel (%p598) target = $region48
        $region47: #{tpu_custom_call.1} parent=39 // pred_region
          %s602 = ssub.s32 128, 128
          %603 = vsyncadd %s594, %s602
          %s604 = smul.addr %s27, 2
          %s605 = smul.addr %s26, 4
          %s606 = sadd.s32 %s604, %s605
          %s607 = smul.addr %s606, 64
          %s608 = scalar_lea.hbm %s5, %s607
          %s610 = sshll.u32 %s597, 4
          %s611 = int_to_ptr.vmem [resolvable:$true] %s610
          %613 = dma.vmem_to_hbm [thread:$0]  %s611, 128, %s608, %s594
        $region48: #{tpu_custom_call.1} parent=39 // pred_fallthru
          _
      $region40: #{tpu_custom_call.1} parent=5 // pred_fallthru
        _
      %p614 = scmp.le.s32.totalorder 2, %s17
      // Predicated region
      $region49: #{tpu_custom_call.1} parent=5 // pred_check
        %p615 = pneg %p614
      $region50: #{tpu_custom_call.1} parent=5 // pred_check_branch
        %617 = sbr.rel (%p615) target = $region52
      $region51: #{tpu_custom_call.1} parent=5 // pred_region
        %s618 = ssub.s32 %s17, 2
        // Predicated region
        $region53: #{tpu_custom_call.1} parent=51 // pred_check
          %p619 = pneg %p187
        $region54: #{tpu_custom_call.1} parent=51 // pred_check_branch
          %621 = sbr.rel (%p619) target = $region56
        $region55: #{tpu_custom_call.1} parent=51 // pred_region
          %s622 = sand.u32 %s172, 1
          %s623 = scalar_lea.sflag [#allocation5], %s622
          %s624 = sand.u32 %s172, 1
          %s625 = smul.addr %s624, 8
          %s626 = scalar_lea.vmem [#allocation6], %s625
          %627 = dma.done %s623, 128
        $region56: #{tpu_custom_call.1} parent=51 // pred_fallthru
          _
      $region52: #{tpu_custom_call.1} parent=5 // pred_fallthru
        _
    $region6: #{tpu_custom_call.1} parent=1 // loop_footer
      %s21 = sadd.s32 1, %s17
    $region7: #{tpu_custom_call.1} parent=1 // loop_footer_branch
      %16 = sbr.rel target = $region3
    $region8: #{tpu_custom_call.1} parent=1 // loop_exit
      _
    %628 = vsyncpa [#allocation4], 1
    %s629 = scalar_lea.sflag [#allocation4], 1
    %630 = vsyncpa %s629, 1
    %631 = vsyncpa [#allocation5], 1
    %s632 = scalar_lea.sflag [#allocation5], 1
    %633 = vsyncpa %s632, 1

</llo_original>
